<compile_context>
chip_gen: v5e
topology: v5e:2x2
jax: 0.10.0
libtpu: 0.0.40
codegen_flags: <defaults>
</compile_context>

<pallas_src>
import functools

import jax
import jax.numpy as jnp
from jax.experimental import pallas as pl
from jax.experimental.pallas import tpu as pltpu


# -----------------------------------------------------------------------------
# pltpu.roll direction probe (robustness against rotate-convention changes)
# -----------------------------------------------------------------------------
@functools.lru_cache(maxsize=None)
def _roll_matches_numpy() -> bool:
    """True iff pltpu.roll(x, s, axis) == np.roll(x, s, axis)."""
    x = jnp.arange(8 * 128, dtype=jnp.float32).reshape(8, 128)

    def k(x_ref, o_ref):
        o_ref[...] = pltpu.roll(x_ref[...], 1, 1)

    y = pl.pallas_call(k, out_shape=jax.ShapeDtypeStruct((8, 128), jnp.float32))(x)
    return bool(jnp.array_equal(y, jnp.roll(x, 1, axis=1)))


# -----------------------------------------------------------------------------
# in-kernel helpers
# -----------------------------------------------------------------------------
def _silu(v):
    return v * jax.nn.sigmoid(v)


def _group_norm(h2, m, mt, gamma, beta, *, denom, eps):
    """GroupNorm on a (C, HWp) slab (channels on sublanes, pixels on lanes).

    m: (C, G) one-hot channel->group map, mt: (G, C); gamma/beta: (C, 1).
    Group statistics via tiny MXU matmuls (no lane-splitting reshapes);
    the affine is folded into a single fused scale/shift (2 VPU passes).
    Pad lanes (>= real HW) must hold zeros on entry; `denom` counts real
    pixels * channels-per-group only.
    """
    f32 = jnp.float32
    s = jnp.sum(h2, axis=1, keepdims=True)                      # (C, 1)
    sq = jnp.sum(h2 * h2, axis=1, keepdims=True)                # (C, 1)
    inv = 1.0 / denom
    gmean = jnp.dot(mt, s, preferred_element_type=f32) * inv    # (G, 1)
    gmsq = jnp.dot(mt, sq, preferred_element_type=f32) * inv    # (G, 1)
    gvar = jnp.maximum(gmsq - gmean * gmean, 0.0)               # clamp cancellation
    grstd = jax.lax.rsqrt(gvar + eps)
    cmean = jnp.dot(m, gmean, preferred_element_type=f32)       # (C, 1)
    crstd = jnp.dot(m, grstd, preferred_element_type=f32)       # (C, 1)
    scale = crstd * gamma                                       # (C, 1)
    shift = beta - cmean * scale                                # (C, 1)
    return h2 * scale + shift                                   # 2 VPU passes


# -----------------------------------------------------------------------------
# fused ResBlock kernel: one grid step == one batch element, fully in VMEM
# -----------------------------------------------------------------------------
def _resblock_kernel(*refs, H, W, HW, HWp, C, Cout, G, eps, mxu_dtype,
                     roll_sign, has_skip_conv):
    if has_skip_conv:
        (x_ref, emb_ref, g1, b1, m1, m1t, w1, bc1, wemb, bemb,
         g2, b2, m2, m2t, w2, bc2, wskip, bskip, out_ref) = refs
    else:
        (x_ref, emb_ref, g1, b1, m1, m1t, w1, bc1, wemb, bemb,
         g2, b2, m2, m2t, w2, bc2, out_ref) = refs
        wskip = bskip = None

    f32 = jnp.float32
    x2 = x_ref[0].astype(f32)                     # (C, HWp); lanes >= HW are zero

    # flattened spatial coordinates, shared by both convs' border masks
    rr = jax.lax.broadcasted_iota(jnp.int32, (1, HWp), 1)
    yy = rr // W
    xx = rr - yy * W

    def conv3x3(h, w_ref, bias_ref):
        """3x3 same-padding conv on a (Cin, HWp) slab as ONE im2col matmul.

        Shifted taps are XLU lane-rolls of the flattened image + per-pixel
        border masks (out-of-image neighbours zeroed), concatenated along
        the sublane axis (Cin is a multiple of 8 -> tile-aligned) and
        contracted against the pre-flattened (Cout, 9*Cin) weight in a
        single MXU matmul with f32 accumulation.
        """
        taps = []
        for k in range(9):
            dy, dx = k // 3 - 1, k % 3 - 1
            off = dy * W + dx                     # flattened-pixel offset of tap
            t = h if off == 0 else pltpu.roll(h, (roll_sign * -off) % HWp, 1)
            conds = []
            if dy < 0:
                conds.append(yy >= -dy)
            if dy > 0:
                conds.append(yy < H - dy)
            if dx < 0:
                conds.append(xx >= -dx)
            if dx > 0:
                conds.append(xx < W - dx)
            if conds:
                ok = conds[0]
                for c in conds[1:]:
                    ok = ok & c
                t = t * ok.astype(f32)            # zero out-of-image neighbours
            taps.append(t)
        col = jnp.concatenate(taps, axis=0).astype(mxu_dtype)   # (9*Cin, HWp)
        return jnp.dot(w_ref[...], col, preferred_element_type=f32) + bias_ref[...]

    # ---- in_layers: GroupNorm -> SiLU -> Conv3x3 ---------------------------
    h = _group_norm(x2, m1[...], m1t[...], g1[...], b1[...],
                    denom=float(HW * (C // G)), eps=eps)
    h = conv3x3(_silu(h), w1, bc1)                               # (Cout, HWp)

    # ---- emb_layers: SiLU -> Linear, broadcast over spatial ----------------
    e = _silu(emb_ref[0].astype(f32))                            # (E, 1)
    h = h + (jnp.dot(wemb[...], e.astype(mxu_dtype),
                     preferred_element_type=f32) + bemb[...])

    # ---- out_layers: GroupNorm -> SiLU -> Dropout(eval: id) -> Conv3x3 -----
    if HWp != HW:                        # keep lane padding out of GN2 stats
        h = h * (rr < HW).astype(f32)
    h = _group_norm(h, m2[...], m2t[...], g2[...], b2[...],
                    denom=float(HW * (Cout // G)), eps=eps)
    h = conv3x3(_silu(h), w2, bc2)

    # ---- skip connection + residual add ------------------------------------
    if has_skip_conv:
        skip = jnp.dot(wskip[...], x2.astype(mxu_dtype),
                       preferred_element_type=f32) + bskip[...]
    else:
        skip = x2
    out_ref[0] = (skip + h)[:, :HW].astype(out_ref.dtype)


# -----------------------------------------------------------------------------
# wrapper (NCHW in / NCHW out: no layout transposes around the kernel)
# -----------------------------------------------------------------------------
def _group_onehot(C, G):
    g = jnp.arange(C, dtype=jnp.int32) // (C // G)
    m = (g[:, None] == jnp.arange(G, dtype=jnp.int32)[None, :]).astype(jnp.float32)
    return m, m.T


def resblock_pallas(x_nchw, emb, params, *, num_groups=32, eps=1e-5,
                    mxu_dtype=jnp.bfloat16):
    """x_nchw: (B, C, H, W), emb: (B, E) -> (B, C_out, H, W)."""
    B, C, H, W = x_nchw.shape
    E = emb.shape[-1]
    Cout = params["conv1_b"].shape[0]
    G = num_groups
    HW = H * W
    HWp = ((HW + 127) // 128) * 128            # lane-pad spatial dim to full tiles
    has_skip_conv = "skip_w" in params
    roll_sign = 1 if _roll_matches_numpy() else -1

    m1, m1t = _group_onehot(C, G)
    m2, m2t = _group_onehot(Cout, G)
    # 3x3 HWIO weights flattened to (Cout, 9*Cin) once on the host; MXU
    # operands pre-cast (bf16 halves the weight DMA bytes).
    w1 = params["conv1_w"].reshape(9 * C, Cout).T.astype(mxu_dtype)
    w2 = params["conv2_w"].reshape(9 * Cout, Cout).T.astype(mxu_dtype)
    wemb = params["emb_w"].T.astype(mxu_dtype)                   # (Cout, E)

    x3 = x_nchw.reshape(B, C, HW)              # metadata-only reshape (NCHW kept)
    if HWp != HW:                              # toy sizes only; real HW % 128 == 0
        x3 = jnp.pad(x3, ((0, 0), (0, 0), (0, HWp - HW)))
    emb3 = emb.reshape(B, E, 1)
    col = lambda v: v.reshape(-1, 1).astype(jnp.float32)

    args = [
        x3, emb3,
        col(params["gn1_w"]), col(params["gn1_b"]), m1, m1t,
        w1, col(params["conv1_b"]),
        wemb, col(params["emb_b"]),
        col(params["gn2_w"]), col(params["gn2_b"]), m2, m2t,
        w2, col(params["conv2_b"]),
    ]
    in_specs = [
        pl.BlockSpec((1, C, HWp), lambda b: (b, 0, 0)),      # x (NCHW, HW flattened)
        pl.BlockSpec((1, E, 1), lambda b: (b, 0, 0)),        # emb column
        pl.BlockSpec((C, 1), lambda b: (0, 0)),              # gn1 gamma
        pl.BlockSpec((C, 1), lambda b: (0, 0)),              # gn1 beta
        pl.BlockSpec((C, G), lambda b: (0, 0)),              # channel->group one-hot
        pl.BlockSpec((G, C), lambda b: (0, 0)),
        pl.BlockSpec((Cout, 9 * C), lambda b: (0, 0)),       # conv1 im2col weight
        pl.BlockSpec((Cout, 1), lambda b: (0, 0)),           # conv1 bias
        pl.BlockSpec((Cout, E), lambda b: (0, 0)),           # emb linear W^T
        pl.BlockSpec((Cout, 1), lambda b: (0, 0)),           # emb linear bias
        pl.BlockSpec((Cout, 1), lambda b: (0, 0)),           # gn2 gamma
        pl.BlockSpec((Cout, 1), lambda b: (0, 0)),           # gn2 beta
        pl.BlockSpec((Cout, G), lambda b: (0, 0)),
        pl.BlockSpec((G, Cout), lambda b: (0, 0)),
        pl.BlockSpec((Cout, 9 * Cout), lambda b: (0, 0)),    # conv2 im2col weight
        pl.BlockSpec((Cout, 1), lambda b: (0, 0)),           # conv2 bias
    ]
    if has_skip_conv:
        args += [params["skip_w"].T.astype(mxu_dtype), col(params["skip_b"])]
        in_specs += [pl.BlockSpec((Cout, C), lambda b: (0, 0)),
                     pl.BlockSpec((Cout, 1), lambda b: (0, 0))]

    kernel = functools.partial(
        _resblock_kernel, H=H, W=W, HW=HW, HWp=HWp, C=C, Cout=Cout, G=G,
        eps=eps, mxu_dtype=mxu_dtype, roll_sign=roll_sign,
        has_skip_conv=has_skip_conv)

    out = pl.pallas_call(
        kernel,
        out_shape=jax.ShapeDtypeStruct((B, Cout, HW), x_nchw.dtype),
        grid_spec=pltpu.PrefetchScalarGridSpec(
            num_scalar_prefetch=0,
            grid=(B,),
            in_specs=in_specs,
            out_specs=pl.BlockSpec((1, Cout, HW), lambda b: (b, 0, 0)),
        ),
        compiler_params=pltpu.CompilerParams(
            dimension_semantics=("parallel",),   # safe: no cross-step state
            vmem_limit_bytes=48 * 1024 * 1024),
    )(*args)

    return out.reshape(B, Cout, H, W)            # metadata-only reshape


# -----------------------------------------------------------------------------
# pure-JAX reference (mirrors the PyTorch ResBlock forward, eval mode, NCHW)
# -----------------------------------------------------------------------------
def _group_norm_ref(x, G, gamma, beta, eps):
    B, C, H, W = x.shape
    xg = x.reshape(B, G, C // G, H, W)
    mean = jnp.mean(xg, axis=(2, 3, 4), keepdims=True)
    var = jnp.mean((xg - mean) ** 2, axis=(2, 3, 4), keepdims=True)
    xn = ((xg - mean) / jnp.sqrt(var + eps)).reshape(B, C, H, W)
    return xn * gamma[None, :, None, None] + beta[None, :, None, None]


def _conv3x3_ref(x, w, b):
    y = jax.lax.conv_general_dilated(
        x, w, window_strides=(1, 1), padding=((1, 1), (1, 1)),
        dimension_numbers=("NCHW", "HWIO", "NCHW"),
        precision=jax.lax.Precision.HIGHEST)
    return y + b[None, :, None, None]


def resblock_ref(x, emb, params, *, num_groups=32, eps=1e-5):
    h = _group_norm_ref(x, num_groups, params["gn1_w"], params["gn1_b"], eps)
    h = h * jax.nn.sigmoid(h)
    h = _conv3x3_ref(h, params["conv1_w"], params["conv1_b"])
    e = emb * jax.nn.sigmoid(emb)
    emb_out = e @ params["emb_w"] + params["emb_b"]
    h = h + emb_out[:, :, None, None]
    h = _group_norm_ref(h, num_groups, params["gn2_w"], params["gn2_b"], eps)
    h = h * jax.nn.sigmoid(h)
    # Dropout: eval mode -> identity
    h = _conv3x3_ref(h, params["conv2_w"], params["conv2_b"])
    if "skip_w" in params:
        skip = jnp.einsum("bchw,cd->bdhw", x, params["skip_w"],
                          precision=jax.lax.Precision.HIGHEST)
        skip = skip + params["skip_b"][None, :, None, None]
    else:
        skip = x
    return skip + h


# -----------------------------------------------------------------------------
def make_params(key, C, Cout, E):
    ks = jax.random.split(key, 12)
    p = {
        "gn1_w": 1.0 + 0.1 * jax.random.normal(ks[0], (C,), jnp.float32),
        "gn1_b": 0.1 * jax.random.normal(ks[1], (C,), jnp.float32),
        "conv1_w": 0.05 * jax.random.normal(ks[2], (3, 3, C, Cout), jnp.float32),
        "conv1_b": 0.05 * jax.random.normal(ks[3], (Cout,), jnp.float32),
        "emb_w": 0.05 * jax.random.normal(ks[4], (E, Cout), jnp.float32),
        "emb_b": 0.05 * jax.random.normal(ks[5], (Cout,), jnp.float32),
        "gn2_w": 1.0 + 0.1 * jax.random.normal(ks[6], (Cout,), jnp.float32),
        "gn2_b": 0.1 * jax.random.normal(ks[7], (Cout,), jnp.float32),
        # the module zero-inits conv2 (zero_module); use random weights so the
        # second conv path is actually exercised.
        "conv2_w": 0.05 * jax.random.normal(ks[8], (3, 3, Cout, Cout), jnp.float32),
        "conv2_b": 0.05 * jax.random.normal(ks[9], (Cout,), jnp.float32),
    }
    if Cout != C:
        p["skip_w"] = 0.05 * jax.random.normal(ks[10], (C, Cout), jnp.float32)
        p["skip_b"] = 0.05 * jax.random.normal(ks[11], (Cout,), jnp.float32)
    return p


if __name__ == "__main__":
    B, H, W, E, G = 2, 8, 8, 16, 32
    key = jax.random.PRNGKey(0)

    # case 1: out_channels != channels (1x1 skip conv); case 2: identity skip
    for C, Cout in [(32, 64), (32, 32)]:
        kcase = jax.random.fold_in(key, Cout)
        kx, ke, kp = jax.random.split(kcase, 3)
        x = jax.random.normal(kx, (B, C, H, W), dtype=jnp.float32)   # NCHW
        emb = jax.random.normal(ke, (B, E), dtype=jnp.float32)
        params = make_params(kp, C, Cout, E)

        ref = resblock_ref(x, emb, params, num_groups=G)

        # exactness check: f32 MXU operands
        out32 = jax.block_until_ready(
            resblock_pallas(x, emb, params, num_groups=G, mxu_dtype=jnp.float32))
        assert out32.shape == (B, Cout, H, W)
        err32 = float(jnp.max(jnp.abs(out32 - ref)))
        assert jnp.allclose(out32, ref, atol=2e-3, rtol=2e-3), err32

        # production path: bf16 MXU operands, f32 accumulation / element-wise
        outbf = jax.block_until_ready(
            resblock_pallas(x, emb, params, num_groups=G))
        assert outbf.shape == (B, Cout, H, W)
        rel = float(jnp.linalg.norm(outbf - ref) / jnp.linalg.norm(ref))
        errbf = float(jnp.max(jnp.abs(outbf - ref)))
        assert rel < 8e-2 and errbf < 5e-1, (rel, errbf)

    print("KERNEL_OK")
</pallas_src>

<mosaic_0001>
module attributes {stable_mosaic.version = 11 : i64} {
  func.func @k(%arg0: memref<8x128xf32, #tpu.memory_space<vmem>>, %arg1: memref<8x128xf32, #tpu.memory_space<vmem>>) attributes {dimension_semantics = [], scalar_prefetch = 0 : i64, scratch_operands = 0 : i64, tpu.core_type = #tpu.core_type<tc>} {
    %c0 = arith.constant 0 : index
    %c0_0 = arith.constant 0 : index
    %0 = vector.load %arg0[%c0, %c0_0] : memref<8x128xf32, #tpu.memory_space<vmem>>, vector<8x128xf32>
    %c1_i32 = arith.constant 1 : i32
    %1 = tpu.dynamic_rotate %0 by %c1_i32 dim 1 : vector<8x128xf32>, i32 -> vector<8x128xf32>
    %c0_1 = arith.constant 0 : index
    %c0_2 = arith.constant 0 : index
    %2 = vector.load %arg1[%c0_1, %c0_2] : memref<8x128xf32, #tpu.memory_space<vmem>>, vector<8x128xf32>
    tpu.vector_store %arg1[%c0_1, %c0_2], %1 {strides = array<i32>} : memref<8x128xf32, #tpu.memory_space<vmem>>, vector<8x128xf32>,
    return
  }
}

</mosaic_0001>

<llo_original>
// kernel: tpu_custom_call.1
$region0: #{tpu_custom_call.1}
  #allocation0 [shape = 'u32[]', space=smem, size = 0x4, offset = 0x4, fixed_abs, tag = 'smem constant byte address 0x4 - core index']
  #allocation1 [shape = 'u32[72,128]{1,0:T(1,128)}', space=vmem, size = 0x9000, scoped, tag = 'internal scratch']
  %s0 = inlined_call_operand.hbm [shape: f32[8,128], index: 0, kind: input, shape index: {}]
  %s1 = inlined_call_operand.hbm [shape: f32[8,128], index: 1, kind: output, shape index: {}]
  %s2 = sld [smem:[#allocation0]]
  $region18: #{tpu_custom_call.1} parent=0
    _
  %s4 = ssub.s32 1, %s2
  %s5 = scalar_select 0, %s4, %s2
  $region1: #{tpu_custom_call.1} parent=0
    #allocation2 [shape = 'u8[4096]{0}', space=vmem, size = 0x1000, scoped, tag = 'input window, operand 0, single buffered']
    #allocation3 [shape = 's32[1]{0}', space=sflag, size = 0x4, scoped, tag = 'scoped memory for tpu_custom_call.1']
    #allocation4 [shape = 's32[1]{0}', space=sflag, size = 0x4, scoped, tag = 'scoped memory for tpu_custom_call.1']
    #allocation5 [shape = 'u8[4096]{0}', space=vmem, size = 0x1000, scoped, tag = 'output window, operand 0, single buffered']
    %6 = vsyncpa [#allocation3], 0
    %7 = vsyncpa [#allocation4], 0
    // Predicated region
    $region2: #{tpu_custom_call.1} parent=1 // pred_check
      _
    $region3: #{tpu_custom_call.1} parent=1 // pred_check_branch
      %9 = sbr.rel (0) target = $region5
    $region4: #{tpu_custom_call.1} parent=1 // pred_region
      %11 = vsyncadd [#allocation3], 0
      %s13 = sshll.u32 %s0, 4
      %s14 = int_to_ptr.hbm [resolvable:$true] %s13
      %s15 = sshll.u32 [#allocation2], 4
      %s16 = int_to_ptr.vmem [resolvable:$true] %s15
      %18 = dma.hbm_to_vmem [thread:$0]  %s14, 128, %s16, [#allocation3]
    $region5: #{tpu_custom_call.1} parent=1 // pred_fallthru
      _
    // Predicated region
    $region6: #{tpu_custom_call.1} parent=1 // pred_check
      _
    $region7: #{tpu_custom_call.1} parent=1 // pred_check_branch
      %20 = sbr.rel (0) target = $region9
    $region8: #{tpu_custom_call.1} parent=1 // pred_region
      %22 = dma.done [#allocation3], 128
    $region9: #{tpu_custom_call.1} parent=1 // pred_fallthru
      _
    %v23 = vld [vmem:[#allocation2] sm:$0xff]
    %24 = vrot.lane.b32.xlu0 %v23, 1
    %v25 = vpop.permute.xlu0 %24
    %26 = vst [vmem:[#allocation5] sm:$0xff] %v25
    // Predicated region
    $region10: #{tpu_custom_call.1} parent=1 // pred_check
      _
    $region11: #{tpu_custom_call.1} parent=1 // pred_check_branch
      %28 = sbr.rel (0) target = $region13
    $region12: #{tpu_custom_call.1} parent=1 // pred_region
      %30 = vsyncadd [#allocation4], 0
      %s32 = sshll.u32 [#allocation5], 4
      %s33 = int_to_ptr.vmem [resolvable:$true] %s32
      %s34 = sshll.u32 %s1, 4
      %s35 = int_to_ptr.hbm [resolvable:$true] %s34
      %37 = dma.vmem_to_hbm [thread:$0]  %s33, 128, %s35, [#allocation4]
    $region13: #{tpu_custom_call.1} parent=1 // pred_fallthru
      _
    // Predicated region
    $region14: #{tpu_custom_call.1} parent=1 // pred_check
      _
    $region15: #{tpu_custom_call.1} parent=1 // pred_check_branch
      %39 = sbr.rel (0) target = $region17
    $region16: #{tpu_custom_call.1} parent=1 // pred_region
      %41 = dma.done [#allocation4], 128
    $region17: #{tpu_custom_call.1} parent=1 // pred_fallthru
      _
    %42 = vsyncpa [#allocation3], 1
    %43 = vsyncpa [#allocation4], 1

</llo_original>
